<compile_context>
chip_gen: v7x
topology: tpu7x:2x2x1
jax: 0.10.0
libtpu: 0.0.40
codegen_flags: <defaults>
</compile_context>

<pallas_src>
import numpy as np

import jax
import jax.numpy as jnp
from jax.experimental import pallas as pl
from jax.experimental.pallas import tpu as pltpu


# ----------------------------------------------------------------------------
# Kernel: one (2, TM, N) planar field block per grid step.
#   xtrig_ref : (2, N)   row 0 = cos(kf*x^2), row 1 = sin(kf*x^2)   (lanes)
#   ytrig_ref : (TM, 2)  col 0 = cos(kf*y^2), col 1 = sin(kf*y^2)   (sublanes)
#   v_ref/o_ref : (2, TM, N)  plane 0 = real, plane 1 = imag
# Math (angle addition, Fi = kf*(x^2 + y^2)):
#   C = cy*cx - sy*sx ;  S = sy*cx + cy*sx
#   out_re = re*C + im*S ;  out_im = im*C - re*S        (== field * exp(-i*Fi))
# ----------------------------------------------------------------------------
def _convert_inverse_kernel(xtrig_ref, ytrig_ref, v_ref, o_ref):
    cx = xtrig_ref[0:1, :]            # (1, N)
    sx = xtrig_ref[1:2, :]            # (1, N)
    cy = ytrig_ref[:, 0:1]            # (TM, 1)
    sy = ytrig_ref[:, 1:2]            # (TM, 1)

    # Full-plane cos/sin via angle addition -- VALU only, no per-element EUP.
    c = cy * cx - sy * sx             # cos(Fi), (TM, N)
    s = sy * cx + cy * sx             # sin(Fi), (TM, N)

    re = v_ref[0, :, :]
    im = v_ref[1, :, :]
    o_ref[0, :, :] = re * c + im * s
    o_ref[1, :, :] = im * c - re * s


def _pick_row_tile(n, batch, max_block_bytes):
    """Rows per (2, TM, N) float32 field block.

    TM is a multiple of 8 (ragged last block allowed) or the full extent N.
    When batch == 1 the row axis is split into >= 2 blocks so both v7x
    TensorCores receive work through the 'parallel' grid dimension.
    """
    if n <= 8:
        return n                                   # full-extent block (legal)
    row_bytes = 2 * n * 4                          # one re row + one im row
    tm = (max_block_bytes // row_bytes) // 8 * 8   # multiple of 8
    tm = max(8, tm)
    if tm >= n:
        if n % 8 == 0:
            tm = n
        else:
            tm = max(8, (n // 8) * 8)              # < n, ragged last block
    if batch == 1 and tm >= n:
        tm = max(8, ((n // 2) // 8) * 8)           # force >= 2 row blocks
    return tm


def cartesian2spherer(Fin, gridsize, curvature, wavelength, *,
                      max_block_bytes=4 << 20):
    """JAX/Pallas equivalent of Cartesian2Spherer.forward.

    Fin: complex64 array of shape (..., N, N) (square spatial grid).
    gridsize, curvature, wavelength: Python floats.
    Returns (Fout, gridsize, curvature) exactly like the PyTorch module.
    """
    if curvature == 0.0:
        return Fin, gridsize, curvature

    Fin = jnp.asarray(Fin)
    if Fin.dtype != jnp.complex64:
        Fin = Fin.astype(jnp.complex64)

    orig_shape = Fin.shape
    N = orig_shape[-1]
    assert orig_shape[-2] == N, "spatial grid must be square"
    lead = orig_shape[:-2]
    B = int(np.prod(lead)) if lead else 1

    # ---- host-side float64 1-D phase factors (Fi is separable) -------------
    f = -1.0 / curvature
    k = 2.0 * np.pi / wavelength
    kf = k / (2.0 * f)
    delta = gridsize / N
    coord = (np.arange(N, dtype=np.float64) - (N // 2)) * delta
    phi = kf * coord * coord                 # same 1-D phase for X and Y
    cos1 = np.cos(phi)
    sin1 = np.sin(phi)
    xtrig = jnp.asarray(np.stack([cos1, sin1], axis=0), dtype=jnp.float32)  # (2, N)
    ytrig = jnp.asarray(np.stack([cos1, sin1], axis=1), dtype=jnp.float32)  # (N, 2)

    # ---- complex64 -> packed planar float32 (2, B, N, N), one fused pass ---
    # TODO(synk): lax.bitcast_convert_type rejects complex dtypes, so a true
    # zero-copy complex<->f32 view is not expressible; the split/recombine
    # below each cost one fused HBM pass outside the kernel.
    v = jnp.stack([jnp.real(Fin), jnp.imag(Fin)], axis=0).reshape(2, B, N, N)

    TM = _pick_row_tile(N, B, max_block_bytes)
    R = pl.cdiv(N, TM)

    xspec = pl.BlockSpec((2, N), lambda b, r: (0, 0))
    yspec = pl.BlockSpec((TM, 2), lambda b, r: (r, 0))
    fspec = pl.BlockSpec((2, None, TM, N), lambda b, r: (0, b, r, 0))

    block_bytes = 2 * TM * N * 4
    vmem_need = (4 * block_bytes                 # field in+out, double-buffered
                 + 4 * block_bytes               # headroom: elementwise temps
                 + 2 * 8 * N * 4                 # xtrig (sublane-padded) x2
                 + 2 * TM * 128 * 4              # ytrig (lane-padded) x2
                 + (2 << 20))                    # misc headroom
    vmem_limit = int(min(max(vmem_need, 16 << 20), 48 << 20))  # v7x-safe cap

    n_elem = B * N * N
    cost = pl.CostEstimate(
        flops=12 * n_elem,                       # C,S rebuild + complex mul
        transcendentals=0,
        bytes_accessed=16 * n_elem + 4 * 4 * N,  # field in+out + tiny trig
    )

    out = pl.pallas_call(
        _convert_inverse_kernel,
        out_shape=jax.ShapeDtypeStruct((2, B, N, N), jnp.float32),
        grid_spec=pltpu.PrefetchScalarGridSpec(
            num_scalar_prefetch=0,
            grid=(B, R),
            in_specs=[xspec, yspec, fspec],
            out_specs=fspec,
        ),
        compiler_params=pltpu.CompilerParams(
            dimension_semantics=("parallel", "parallel"),
            vmem_limit_bytes=vmem_limit,
        ),
        cost_estimate=cost,
    )(xtrig, ytrig, v)

    # ---- packed planar float32 -> complex64, one fused pass ----------------
    Fout = jax.lax.complex(out[0], out[1]).reshape(orig_shape)
    return Fout, gridsize, curvature


class Cartesian2Spherer:
    """Thin module-like wrapper matching the PyTorch class interface."""

    def __init__(self, wavelength):
        self.wavelength = wavelength

    def __call__(self, Fin, gridsize, curvature):
        return cartesian2spherer(Fin, gridsize, curvature, self.wavelength)


def _reference(Fin, gridsize, curvature, wavelength):
    """Float64 NumPy reference mirroring the PyTorch code."""
    if curvature == 0.0:
        return np.asarray(Fin)
    x = np.asarray(Fin).astype(np.complex128)
    N = x.shape[-1]
    f = -1.0 / curvature
    k = 2.0 * np.pi / wavelength
    kf = k / (2.0 * f)
    delta = gridsize / N
    coord = (np.arange(N, dtype=np.float64) - (N // 2)) * delta
    phi = kf * coord * coord
    Fi = phi[:, None] + phi[None, :]
    return (x / np.exp(1j * Fi)).astype(np.complex64)


if __name__ == "__main__":
    key = jax.random.PRNGKey(0)
    B, N = 2, 64                       # small square grid
    k1, k2 = jax.random.split(key)
    re = jax.random.normal(k1, (B, N, N), dtype=jnp.float32)
    im = jax.random.normal(k2, (B, N, N), dtype=jnp.float32)
    Fin = jax.lax.complex(re, im)      # complex64

    wavelength = 1.064e-6   # 1064 nm laser
    gridsize = 2.0e-3       # 2 mm physical grid size
    curvature = 0.5         # non-zero -> spherical conversion path

    module = Cartesian2Spherer(wavelength)
    Fout, size_out, curv_out = module(Fin, gridsize, curvature)
    Fout = jax.block_until_ready(Fout)

    Fref = _reference(Fin, gridsize, curvature, wavelength)
    assert np.allclose(np.asarray(Fout), Fref, atol=1e-4, rtol=1e-4), \
        "mismatch vs reference"
    assert size_out == gridsize and curv_out == curvature

    # curvature == 0 path: field returned unchanged.
    F0, _, _ = module(Fin, gridsize, 0.0)
    assert jnp.array_equal(F0, Fin)

    print("KERNEL_OK")
</pallas_src>

<mosaic_0001>
module attributes {stable_mosaic.version = 11 : i64} {
  func.func @_convert_inverse_kernel(%arg0: i32, %arg1: i32, %arg2: memref<2x64xf32, #tpu.memory_space<vmem>>, %arg3: memref<64x2xf32, #tpu.memory_space<vmem>>, %arg4: memref<2x1x64x64xf32, #tpu.memory_space<vmem>>, %arg5: memref<2x1x64x64xf32, #tpu.memory_space<vmem>>) attributes {dimension_semantics = [#tpu.dimension_semantics<parallel>, #tpu.dimension_semantics<parallel>], iteration_bounds = array<i64: 2, 1>, scalar_prefetch = 0 : i64, scratch_operands = 0 : i64, tpu.core_type = #tpu.core_type<tc>, window_params = [{pipeline_mode = #tpu.pipeline_mode<synchronous>, transform_indices = @transform_0, window_bounds = array<i64: 2, 64>}, {transform_indices = @transform_1, window_bounds = array<i64: 64, 2>}, {transform_indices = @transform_2, window_bounds = array<i64: 2, 1, 64, 64>}, {transform_indices = @transform_3, window_bounds = array<i64: 2, 1, 64, 64>}]} {
    %c0 = arith.constant 0 : index
    %c0_0 = arith.constant 0 : index
    %0 = vector.load %arg2[%c0, %c0_0] : memref<2x64xf32, #tpu.memory_space<vmem>>, vector<1x64xf32>
    %c1 = arith.constant 1 : index
    %c0_1 = arith.constant 0 : index
    %1 = vector.load %arg2[%c1, %c0_1] : memref<2x64xf32, #tpu.memory_space<vmem>>, vector<1x64xf32>
    %c0_2 = arith.constant 0 : index
    %c0_3 = arith.constant 0 : index
    %2 = vector.load %arg3[%c0_2, %c0_3] : memref<64x2xf32, #tpu.memory_space<vmem>>, vector<64x1xf32>
    %c0_4 = arith.constant 0 : index
    %c1_5 = arith.constant 1 : index
    %3 = vector.load %arg3[%c0_4, %c1_5] : memref<64x2xf32, #tpu.memory_space<vmem>>, vector<64x1xf32>
    %4 = vector.broadcast %2 : vector<64x1xf32> to vector<64x64xf32>
    %5 = vector.broadcast %0 : vector<1x64xf32> to vector<64x64xf32>
    %6 = arith.mulf %4, %5 : vector<64x64xf32>
    %7 = vector.broadcast %3 : vector<64x1xf32> to vector<64x64xf32>
    %8 = vector.broadcast %1 : vector<1x64xf32> to vector<64x64xf32>
    %9 = arith.mulf %7, %8 : vector<64x64xf32>
    %10 = arith.subf %6, %9 : vector<64x64xf32>
    %11 = vector.broadcast %3 : vector<64x1xf32> to vector<64x64xf32>
    %12 = vector.broadcast %0 : vector<1x64xf32> to vector<64x64xf32>
    %13 = arith.mulf %11, %12 : vector<64x64xf32>
    %14 = vector.broadcast %2 : vector<64x1xf32> to vector<64x64xf32>
    %15 = vector.broadcast %1 : vector<1x64xf32> to vector<64x64xf32>
    %16 = arith.mulf %14, %15 : vector<64x64xf32>
    %17 = arith.addf %13, %16 : vector<64x64xf32>
    %c0_6 = arith.constant 0 : index
    %c0_7 = arith.constant 0 : index
    %c0_8 = arith.constant 0 : index
    %c0_9 = arith.constant 0 : index
    %18 = vector.load %arg4[%c0_6, %c0_7, %c0_8, %c0_9] : memref<2x1x64x64xf32, #tpu.memory_space<vmem>>, vector<1x1x64x64xf32>
    %19 = vector.shape_cast %18 : vector<1x1x64x64xf32> to vector<64x64xf32>
    %c1_10 = arith.constant 1 : index
    %c0_11 = arith.constant 0 : index
    %c0_12 = arith.constant 0 : index
    %c0_13 = arith.constant 0 : index
    %20 = vector.load %arg4[%c1_10, %c0_11, %c0_12, %c0_13] : memref<2x1x64x64xf32, #tpu.memory_space<vmem>>, vector<1x1x64x64xf32>
    %21 = vector.shape_cast %20 : vector<1x1x64x64xf32> to vector<64x64xf32>
    %22 = arith.mulf %19, %10 : vector<64x64xf32>
    %23 = arith.mulf %21, %17 : vector<64x64xf32>
    %24 = arith.addf %22, %23 : vector<64x64xf32>
    %c0_14 = arith.constant 0 : index
    %c0_15 = arith.constant 0 : index
    %c0_16 = arith.constant 0 : index
    %c0_17 = arith.constant 0 : index
    %25 = vector.load %arg5[%c0_14, %c0_15, %c0_16, %c0_17] : memref<2x1x64x64xf32, #tpu.memory_space<vmem>>, vector<1x1x64x64xf32>
    %26 = vector.shape_cast %25 : vector<1x1x64x64xf32> to vector<64x64xf32>
    %27 = vector.shape_cast %24 : vector<64x64xf32> to vector<1x1x64x64xf32>
    tpu.vector_store %arg5[%c0_14, %c0_15, %c0_16, %c0_17], %27 {strides = array<i32>} : memref<2x1x64x64xf32, #tpu.memory_space<vmem>>, vector<1x1x64x64xf32>,
    %28 = arith.mulf %21, %10 : vector<64x64xf32>
    %29 = arith.mulf %19, %17 : vector<64x64xf32>
    %30 = arith.subf %28, %29 : vector<64x64xf32>
    %c1_18 = arith.constant 1 : index
    %c0_19 = arith.constant 0 : index
    %c0_20 = arith.constant 0 : index
    %c0_21 = arith.constant 0 : index
    %31 = vector.load %arg5[%c1_18, %c0_19, %c0_20, %c0_21] : memref<2x1x64x64xf32, #tpu.memory_space<vmem>>, vector<1x1x64x64xf32>
    %32 = vector.shape_cast %31 : vector<1x1x64x64xf32> to vector<64x64xf32>
    %33 = vector.shape_cast %30 : vector<64x64xf32> to vector<1x1x64x64xf32>
    tpu.vector_store %arg5[%c1_18, %c0_19, %c0_20, %c0_21], %33 {strides = array<i32>} : memref<2x1x64x64xf32, #tpu.memory_space<vmem>>, vector<1x1x64x64xf32>,
    return
  }
  func.func @transform_0(%arg0: i32, %arg1: i32) -> (i32, i32) {
    %c0_i32 = arith.constant 0 : i32
    %c0_i32_0 = arith.constant 0 : i32
    %c0_i32_1 = arith.constant 0 : i32
    return %c0_i32, %c0_i32_0 : i32, i32
  }
  func.func @transform_1(%arg0: i32, %arg1: i32) -> (i32, i32) {
    %c0_i32 = arith.constant 0 : i32
    %c0_i32_0 = arith.constant 0 : i32
    return %arg1, %c0_i32 : i32, i32
  }
  func.func @transform_2(%arg0: i32, %arg1: i32) -> (i32, i32, i32, i32) {
    %c0_i32 = arith.constant 0 : i32
    %c0_i32_0 = arith.constant 0 : i32
    %c0_i32_1 = arith.constant 0 : i32
    return %c0_i32, %arg0, %arg1, %c0_i32_0 : i32, i32, i32, i32
  }
  func.func @transform_3(%arg0: i32, %arg1: i32) -> (i32, i32, i32, i32) {
    %c0_i32 = arith.constant 0 : i32
    %c0_i32_0 = arith.constant 0 : i32
    %c0_i32_1 = arith.constant 0 : i32
    return %c0_i32, %arg0, %arg1, %c0_i32_0 : i32, i32, i32, i32
  }
}

</mosaic_0001>

<llo_original>
// kernel: tpu_custom_call.1
$region0: #{tpu_custom_call.1}
  #allocation0 [shape = 'u32[]', space=smem, size = 0x4, offset = 0x4, fixed_abs, tag = 'smem constant byte address 0x4 - core index']
  #allocation1 [shape = 'u32[144,128]{1,0:T(1,128)}', space=vmem, size = 0x12000, scoped, tag = 'internal scratch']
  #allocation6 [shape = 's32[]', space=sflag, size = 0x4, offset = 0, fixed_abs, tag = 'sflag constant byte address 0x0 - dummy sync flag']
  #allocation8 [shape = 's32[]', space=sflag, size = 0x4, offset = 0, fixed_abs, tag = 'sflag constant byte address 0x0 - dummy sync flag']
  %s0 = inlined_call_operand.vmem [shape: f32[2,64], index: 0, kind: input, shape index: {}]
  %s1 = inlined_call_operand.vmem [shape: f32[64,2], index: 1, kind: input, shape index: {}]
  %s2 = inlined_call_operand.hbm [shape: f32[2,2,64,64], index: 2, kind: input, shape index: {}]
  %s3 = inlined_call_operand.hbm [shape: f32[2,2,64,64], index: 3, kind: output, shape index: {}]
  %s4 = sld [smem:[#allocation0]]
  $region49: #{tpu_custom_call.1} parent=0
    _
  %s6 = ssub.s32 1, %s4
  %s7 = scalar_select 0, %s6, %s4
  $region1: #{tpu_custom_call.1} parent=0
    #allocation2 [shape = 'u8[131072]{0}', space=vmem, size = 0x20000, scoped, tag = 'input window, operand 2']
    #allocation3 [shape = 's32[2]{0}', space=sflag, size = 0x8, scoped, tag = 'scoped memory for tpu_custom_call.1']
    #allocation4 [shape = 's32[2]{0}', space=sflag, size = 0x8, scoped, tag = 'scoped memory for tpu_custom_call.1']
    #allocation5 [shape = 'u8[131072]{0}', space=vmem, size = 0x20000, scoped, tag = 'output window, operand 0']
    %8 = vsyncpa [#allocation3], 0
    %s9 = scalar_lea.sflag [#allocation3], 1
    %10 = vsyncpa %s9, 0
    %11 = vsyncpa [#allocation4], 0
    %s12 = scalar_lea.sflag [#allocation4], 1
    %13 = vsyncpa %s12, 0
    loop: start=0, step=1, limit=4
    $region2: #{tpu_custom_call.1} parent=1 // loop_pre_header
      _
    $region3: #{tpu_custom_call.1} parent=1 // loop_header
      %s15 = sphi 0, %s19
      %p16 = scmp.ge.s32.totalorder %s15, 4
      %s22 = sphi 0, %s34
      %s23 = sphi 0, %s30
      %s24 = sphi 0, %s22
      %s25 = sphi 0, %s23
      %s26 = sphi 0, %s24
      %s27 = sphi 0, %s25
      %s35 = sphi 0, %s35
      %s37 = sphi 0, %s35
      %s38 = sphi 0, %s37
      %s52 = sphi 0, %s38
      %s58 = sphi 0, %s60
      %s61 = sphi 0, %s58
      %s62 = sphi 0, %s61
      %s78 = sphi 0, %s62
      %s86 = sphi 0, %s88
      %s89 = sphi 0, %s86
      %s90 = sphi 0, %s89
      %s106 = sphi 0, %s90
      %s114 = sphi 0, %s116
      %s117 = sphi 0, %s114
      %s118 = sphi 0, %s117
      %s134 = sphi 0, %s118
    $region4: #{tpu_custom_call.1} parent=1 // loop_header_branch
      %18 = sbr.rel (%p16) target = $region8
    $region5: #{tpu_custom_call.1} parent=1 // loop_body
      %s20 = ssub.s32 %s15, 1
      %s21 = ssub.s32 %s15, 2
      %s28 = sadd.s32 1, %s23
      %p29 = scmp.ge.s32.totalorder %s28, 1
      %s30 = scalar_select %p29, 0, %s28
      %s31 = sadd.s32 1, %s22
      %s32 = scalar_select %p29, %s31, %s22
      %p33 = scmp.ge.s32.totalorder %s32, 2
      %s34 = scalar_select %p33, 0, %s32
      %s36 = sadd.s32 %s35, 1
      %p39 = scmp.eq.s32.totalorder %s15, 1
      %p40 = scmp.ne.s32.totalorder %s35, %s37
      %p41 = scmp.eq.s32.totalorder %s15, 0
      %p42 = por %p40, %p41
      %p43 = scmp.ne.s32.totalorder %s35, %s37
      %p44 = scmp.eq.s32.totalorder %s20, 1
      %p45 = por %p43, %p44
      %p46 = scmp.ne.s32.totalorder %s37, %s38
      %p47 = scmp.eq.s32.totalorder %s20, 0
      %p48 = por %p46, %p47
      %p49 = scmp.ne.s32.totalorder %s37, %s38
      %p50 = scmp.eq.s32.totalorder %s21, 1
      %p51 = por %p49, %p50
      %p53 = scmp.ne.s32.totalorder %s38, %s52
      %p54 = scmp.eq.s32.totalorder %s21, 0
      %p55 = por %p53, %p54
      %s56 = ssub.s32 %s23, %s30
      %p57 = scmp.eq.s32.totalorder %s56, 0
      %s59 = sadd.s32 %s58, 1
      %s60 = scalar_select %p57, %s58, %s59
      %p63 = pneg %p57
      %p64 = scmp.eq.s32.totalorder %s15, 1
      %p65 = por %p63, %p64
      %p66 = scmp.ne.s32.totalorder %s58, %s61
      %p67 = scmp.eq.s32.totalorder %s15, 0
      %p68 = por %p66, %p67
      %p69 = scmp.ne.s32.totalorder %s58, %s61
      %p70 = scmp.eq.s32.totalorder %s20, 1
      %p71 = por %p69, %p70
      %p72 = scmp.ne.s32.totalorder %s61, %s62
      %p73 = scmp.eq.s32.totalorder %s20, 0
      %p74 = por %p72, %p73
      %p75 = scmp.ne.s32.totalorder %s61, %s62
      %p76 = scmp.eq.s32.totalorder %s21, 1
      %p77 = por %p75, %p76
      %p79 = scmp.ne.s32.totalorder %s62, %s78
      %p80 = scmp.eq.s32.totalorder %s21, 0
      %p81 = por %p79, %p80
      %s82 = ssub.s32 %s22, %s34
      %s83 = ssub.s32 %s23, %s30
      %s84 = sor.u32 %s82, %s83
      %p85 = scmp.eq.s32.totalorder %s84, 0
      %s87 = sadd.s32 %s86, 1
      %s88 = scalar_select %p85, %s86, %s87
      %p91 = pneg %p85
      %p92 = scmp.eq.s32.totalorder %s15, 1
      %p93 = por %p91, %p92
      %p94 = scmp.ne.s32.totalorder %s86, %s89
      %p95 = scmp.eq.s32.totalorder %s15, 0
      %p96 = por %p94, %p95
      %p97 = scmp.ne.s32.totalorder %s86, %s89
      %p98 = scmp.eq.s32.totalorder %s20, 1
      %p99 = por %p97, %p98
      %p100 = scmp.ne.s32.totalorder %s89, %s90
      %p101 = scmp.eq.s32.totalorder %s20, 0
      %p102 = por %p100, %p101
      %p103 = scmp.ne.s32.totalorder %s89, %s90
      %p104 = scmp.eq.s32.totalorder %s21, 1
      %p105 = por %p103, %p104
      %p107 = scmp.ne.s32.totalorder %s90, %s106
      %p108 = scmp.eq.s32.totalorder %s21, 0
      %p109 = por %p107, %p108
      %s110 = ssub.s32 %s22, %s34
      %s111 = ssub.s32 %s23, %s30
      %s112 = sor.u32 %s110, %s111
      %p113 = scmp.eq.s32.totalorder %s112, 0
      %s115 = sadd.s32 %s114, 1
      %s116 = scalar_select %p113, %s114, %s115
      %p119 = pneg %p113
      %p120 = scmp.eq.s32.totalorder %s15, 1
      %p121 = por %p119, %p120
      %p122 = scmp.ne.s32.totalorder %s114, %s117
      %p123 = scmp.eq.s32.totalorder %s15, 0
      %p124 = por %p122, %p123
      %p125 = scmp.ne.s32.totalorder %s114, %s117
      %p126 = scmp.eq.s32.totalorder %s20, 1
      %p127 = por %p125, %p126
      %p128 = scmp.ne.s32.totalorder %s117, %s118
      %p129 = scmp.eq.s32.totalorder %s20, 0
      %p130 = por %p128, %p129
      %p131 = scmp.ne.s32.totalorder %s117, %s118
      %p132 = scmp.eq.s32.totalorder %s21, 1
      %p133 = por %p131, %p132
      %p135 = scmp.ne.s32.totalorder %s118, %s134
      %p136 = scmp.eq.s32.totalorder %s21, 0
      %p137 = por %p135, %p136
      %p138 = scmp.le.s32.totalorder 1, %s15
      %p139 = scmp.lt.s32.totalorder %s15, 3
      %p140 = pnand %p138, %p139
      %p141 = pneg %p140
      // Predicated region
      $region9: #{tpu_custom_call.1} parent=5 // pred_check
        _
      $region10: #{tpu_custom_call.1} parent=5 // pred_check_branch
        %143 = sbr.rel (%p140) target = $region12
      $region11: #{tpu_custom_call.1} parent=5 // pred_region
        %s144 = ssub.s32 %s15, 1
        // Predicated region
        $region13: #{tpu_custom_call.1} parent=11 // pred_check
          %p145 = pneg %p48
        $region14: #{tpu_custom_call.1} parent=11 // pred_check_branch
          %147 = sbr.rel (%p145) target = $region16
        $region15: #{tpu_custom_call.1} parent=11 // pred_region
          _
        $region16: #{tpu_custom_call.1} parent=11 // pred_fallthru
          _
        // Predicated region
        $region17: #{tpu_custom_call.1} parent=11 // pred_check
          %p148 = pneg %p74
        $region18: #{tpu_custom_call.1} parent=11 // pred_check_branch
          %150 = sbr.rel (%p148) target = $region20
        $region19: #{tpu_custom_call.1} parent=11 // pred_region
          %s151 = smul.u32 8, %s25
          %p152 = scmp.lt.s32.totalorder %s151, 7
          %s153 = scalar_select %p152, %s151, 7
          %s154 = smul.addr %s153, 8
          %s155 = scalar_lea.vmem %s1, %s154
          %s156 = smul.u32 8, %s25
        $region20: #{tpu_custom_call.1} parent=11 // pred_fallthru
          _
      $region12: #{tpu_custom_call.1} parent=5 // pred_fallthru
        _
      %p157 = scmp.lt.s32.totalorder %s15, 2
      // Predicated region
      $region21: #{tpu_custom_call.1} parent=5 // pred_check
        %p158 = pneg %p157
      $region22: #{tpu_custom_call.1} parent=5 // pred_check_branch
        %160 = sbr.rel (%p158) target = $region24
      $region23: #{tpu_custom_call.1} parent=5 // pred_region
        // Predicated region
        $region25: #{tpu_custom_call.1} parent=23 // pred_check
          %p161 = pneg %p96
        $region26: #{tpu_custom_call.1} parent=23 // pred_check_branch
          %163 = sbr.rel (%p161) target = $region28
        $region27: #{tpu_custom_call.1} parent=23 // pred_region
          #allocation7 [shape = 'u32[6]{0}', space=smem, size = 0x18, scoped, tag = 'DMA stride descriptor']
          %s164 = sand.u32 %s86, 1
          %s165 = scalar_lea.sflag [#allocation3], %s164
          %s166 = sand.u32 %s86, 1
          %s167 = smul.addr %s166, 128
          %s168 = scalar_lea.vmem [#allocation2], %s167
          %s169 = smul.u32 8, %s23
          %s171 = ssub.s32 2048, 2048
          %172 = vsyncadd %s165, %s171
          %s173 = smul.addr %s22, 8
          %s174 = sadd.s32 %s169, %s173
          %s175 = smul.addr %s174, 128
          %s176 = scalar_lea.hbm %s2, %s175
          %s178 = sshll.u32 1, 14
          %s179 = sxor.u32 4294967295, %s178
          %s181 = sld [smem:[#allocation0]]
          %s182 = sadd.s32 2, %s181
          %s184 = sshll.u32 7, 26
          %s185 = sxor.u32 4294967295, %s184
          %s186 = sand.u32 0, %s185
          %s187 = sshll.u32 %s182, 26
          %s188 = sor.u32 %s186, %s187
          %s189 = sshll.u32 %s168, 4
          %s190 = int_to_ptr.vmem [resolvable:$true] %s189
          %196 = sst [smem:[#allocation7]] 2048
          %s197 = scalar_lea.smem [#allocation7], 1
          %198 = sst [smem:[%s197]] 1024
          %s199 = scalar_lea.smem [#allocation7], 2
          %200 = sst [smem:[%s199]] 8
          %s201 = scalar_lea.smem [#allocation7], 3
          %202 = sst [smem:[%s201]] 128
          %s203 = scalar_lea.smem [#allocation7], 4
          %204 = sst [smem:[%s203]] 128
          %s205 = scalar_lea.smem [#allocation7], 5
          %206 = sst [smem:[%s205]] 8
          %208 = dma.general %s176, 2048, %s190, %s165, [#allocation6], [#allocation7], %s188, 0
        $region28: #{tpu_custom_call.1} parent=23 // pred_fallthru
          _
      $region24: #{tpu_custom_call.1} parent=5 // pred_fallthru
        _
      %p209 = scmp.le.s32.totalorder 1, %s15
      %p210 = scmp.lt.s32.totalorder %s15, 3
      %p211 = pnand %p209, %p210
      %p212 = pneg %p211
      // Predicated region
      $region29: #{tpu_custom_call.1} parent=5 // pred_check
        _
      $region30: #{tpu_custom_call.1} parent=5 // pred_check_branch
        %214 = sbr.rel (%p211) target = $region32
      $region31: #{tpu_custom_call.1} parent=5 // pred_region
        %s215 = ssub.s32 %s15, 1
        %s216 = sand.u32 %s89, 1
        %s217 = scalar_lea.sflag [#allocation3], %s216
        %s218 = sand.u32 %s89, 1
        %s219 = smul.addr %s218, 128
        %s220 = scalar_lea.vmem [#allocation2], %s219
        // Predicated region
        $region33: #{tpu_custom_call.1} parent=31 // pred_check
          %p221 = pneg %p102
        $region34: #{tpu_custom_call.1} parent=31 // pred_check_branch
          %223 = sbr.rel (%p221) target = $region36
        $region35: #{tpu_custom_call.1} parent=31 // pred_region
          %224 = dma.done %s217, 2048
        $region36: #{tpu_custom_call.1} parent=31 // pred_fallthru
          _
        %p225 = pneg %p48
        %p226 = pneg %p45
        %s227 = smul.u32 8, %s25
        %p228 = scmp.lt.s32.totalorder %s227, 7
        %s229 = scalar_select %p228, %s227, 7
        %s230 = smul.addr %s229, 8
        %s231 = scalar_lea.vmem %s1, %s230
        %p232 = pneg %p74
        %p233 = pneg %p71
        %s234 = sand.u32 %s89, 1
        %s235 = scalar_lea.sflag [#allocation3], %s234
        %s236 = sand.u32 %s89, 1
        %s237 = smul.addr %s236, 128
        %s238 = scalar_lea.vmem [#allocation2], %s237
        %p239 = pneg %p102
        %p240 = pneg %p99
        %p241 = pneg %p130
        %p242 = pneg %p127
        %s243 = sand.u32 %s117, 1
        %s244 = scalar_lea.sflag [#allocation4], %s243
        %s245 = sand.u32 %s117, 1
        %s246 = smul.addr %s245, 128
        %s247 = scalar_lea.vmem [#allocation5], %s246
        %s248 = smul.u32 8, %s25
        %p249 = scmp.lt.s32.totalorder %s248, 7
        %s250 = scalar_select %p249, %s248, 7
        %s251 = smul.addr %s250, 8
        %s252 = scalar_lea.vmem %s1, %s251
        %s253 = smul.u32 8, %s25
        %s254 = smul.u32 8, %s25
        %s255 = smul.u32 8, %s25
        %v256 = vld [vmem:[%s0] sm:$0x1]
        %v257 = vld [vmem:[%s0 + $0x1] sm:$0x1]
        %v258 = vld [vmem:[%s252] sm:$0xff]
        %v259 = vld [vmem:[%s252 + $0x8] sm:$0xff]
        %v260 = vld [vmem:[%s252 + $0x10] sm:$0xff]
        %v261 = vld [vmem:[%s252 + $0x18] sm:$0xff]
        %v262 = vld [vmem:[%s252 + $0x20] sm:$0xff]
        %v263 = vld [vmem:[%s252 + $0x28] sm:$0xff]
        %v264 = vld [vmem:[%s252 + $0x30] sm:$0xff]
        %v265 = vld [vmem:[%s252 + $0x38] sm:$0xff]
        %267 = vset.pattern.permute.xlu0 0
        %268 = vperm.xlu0 %267, %v258
        %v269 = vpop.permute.xlu0 %268
        %272 = vset.pattern.permute.xlu0 0
        %273 = vperm.xlu0 %272, %v259
        %v274 = vpop.permute.xlu0 %273
        %277 = vset.pattern.permute.xlu0 0
        %278 = vperm.xlu0 %277, %v260
        %v279 = vpop.permute.xlu0 %278
        %282 = vset.pattern.permute.xlu0 0
        %283 = vperm.xlu0 %282, %v261
        %v284 = vpop.permute.xlu0 %283
        %287 = vset.pattern.permute.xlu0 0
        %288 = vperm.xlu0 %287, %v262
        %v289 = vpop.permute.xlu0 %288
        %292 = vset.pattern.permute.xlu0 0
        %293 = vperm.xlu0 %292, %v263
        %v294 = vpop.permute.xlu0 %293
        %297 = vset.pattern.permute.xlu0 0
        %298 = vperm.xlu0 %297, %v264
        %v299 = vpop.permute.xlu0 %298
        %302 = vset.pattern.permute.xlu0 0
        %303 = vperm.xlu0 %302, %v265
        %v304 = vpop.permute.xlu0 %303
        %v306 = vlaneseq
        %v307 = vshrl.u32 %v306, 7
        %v308 = vsub.s32 0, %v307
        %v309 = vrot.slane %v256, %v308
        %v310 = vmul.f32 %v269, %v309
        %v311 = vmul.f32 %v274, %v309
        %v312 = vmul.f32 %v279, %v309
        %v313 = vmul.f32 %v284, %v309
        %v314 = vmul.f32 %v289, %v309
        %v315 = vmul.f32 %v294, %v309
        %v316 = vmul.f32 %v299, %v309
        %v317 = vmul.f32 %v304, %v309
        %318 = vset.pattern.permute.xlu0 1
        %319 = vperm.xlu0 %318, %v258
        %v320 = vpop.permute.xlu0 %319
        %322 = vset.pattern.permute.xlu0 1
        %323 = vperm.xlu0 %322, %v259
        %v324 = vpop.permute.xlu0 %323
        %326 = vset.pattern.permute.xlu0 1
        %327 = vperm.xlu0 %326, %v260
        %v328 = vpop.permute.xlu0 %327
        %330 = vset.pattern.permute.xlu0 1
        %331 = vperm.xlu0 %330, %v261
        %v332 = vpop.permute.xlu0 %331
        %334 = vset.pattern.permute.xlu0 1
        %335 = vperm.xlu0 %334, %v262
        %v336 = vpop.permute.xlu0 %335
        %338 = vset.pattern.permute.xlu0 1
        %339 = vperm.xlu0 %338, %v263
        %v340 = vpop.permute.xlu0 %339
        %342 = vset.pattern.permute.xlu0 1
        %343 = vperm.xlu0 %342, %v264
        %v344 = vpop.permute.xlu0 %343
        %346 = vset.pattern.permute.xlu0 1
        %347 = vperm.xlu0 %346, %v265
        %v348 = vpop.permute.xlu0 %347
        %v350 = vlaneseq
        %v351 = vshrl.u32 %v350, 7
        %v352 = vsub.s32 0, %v351
        %v353 = vrot.slane %v257, %v352
        %v354 = vmul.f32 %v320, %v353
        %v355 = vmul.f32 %v324, %v353
        %v356 = vmul.f32 %v328, %v353
        %v357 = vmul.f32 %v332, %v353
        %v358 = vmul.f32 %v336, %v353
        %v359 = vmul.f32 %v340, %v353
        %v360 = vmul.f32 %v344, %v353
        %v361 = vmul.f32 %v348, %v353
        %v362 = vsub.f32 %v310, %v354
        %v363 = vsub.f32 %v311, %v355
        %v364 = vsub.f32 %v312, %v356
        %v365 = vsub.f32 %v313, %v357
        %v366 = vsub.f32 %v314, %v358
        %v367 = vsub.f32 %v315, %v359
        %v368 = vsub.f32 %v316, %v360
        %v369 = vsub.f32 %v317, %v361
        %v370 = vmul.f32 %v320, %v309
        %v371 = vmul.f32 %v324, %v309
        %v372 = vmul.f32 %v328, %v309
        %v373 = vmul.f32 %v332, %v309
        %v374 = vmul.f32 %v336, %v309
        %v375 = vmul.f32 %v340, %v309
        %v376 = vmul.f32 %v344, %v309
        %v377 = vmul.f32 %v348, %v309
        %v378 = vmul.f32 %v269, %v353
        %v379 = vmul.f32 %v274, %v353
        %v380 = vmul.f32 %v279, %v353
        %v381 = vmul.f32 %v284, %v353
        %v382 = vmul.f32 %v289, %v353
        %v383 = vmul.f32 %v294, %v353
        %v384 = vmul.f32 %v299, %v353
        %v385 = vmul.f32 %v304, %v353
        %v386 = vadd.f32 %v370, %v378
        %v387 = vadd.f32 %v371, %v379
        %v388 = vadd.f32 %v372, %v380
        %v389 = vadd.f32 %v373, %v381
        %v390 = vadd.f32 %v374, %v382
        %v391 = vadd.f32 %v375, %v383
        %v392 = vadd.f32 %v376, %v384
        %v393 = vadd.f32 %v377, %v385
        %v394 = vld [vmem:[%s220] sm:$0xff]
        %v395 = vld [vmem:[%s220 + $0x8] sm:$0xff]
        %v396 = vld [vmem:[%s220 + $0x10] sm:$0xff]
        %v397 = vld [vmem:[%s220 + $0x18] sm:$0xff]
        %v398 = vld [vmem:[%s220 + $0x20] sm:$0xff]
        %v399 = vld [vmem:[%s220 + $0x28] sm:$0xff]
        %v400 = vld [vmem:[%s220 + $0x30] sm:$0xff]
        %v401 = vld [vmem:[%s220 + $0x38] sm:$0xff]
        %s402 = scalar_lea.vmem %s220, 64 [#allocation2]
        %v403 = vld [vmem:[%s402] sm:$0xff]
        %v404 = vld [vmem:[%s402 + $0x8] sm:$0xff]
        %v405 = vld [vmem:[%s402 + $0x10] sm:$0xff]
        %v406 = vld [vmem:[%s402 + $0x18] sm:$0xff]
        %v407 = vld [vmem:[%s402 + $0x20] sm:$0xff]
        %v408 = vld [vmem:[%s402 + $0x28] sm:$0xff]
        %v409 = vld [vmem:[%s402 + $0x30] sm:$0xff]
        %v410 = vld [vmem:[%s402 + $0x38] sm:$0xff]
        %v411 = vmul.f32 %v394, %v362
        %v412 = vmul.f32 %v395, %v363
        %v413 = vmul.f32 %v396, %v364
        %v414 = vmul.f32 %v397, %v365
        %v415 = vmul.f32 %v398, %v366
        %v416 = vmul.f32 %v399, %v367
        %v417 = vmul.f32 %v400, %v368
        %v418 = vmul.f32 %v401, %v369
        %v419 = vmul.f32 %v403, %v386
        %v420 = vmul.f32 %v404, %v387
        %v421 = vmul.f32 %v405, %v388
        %v422 = vmul.f32 %v406, %v389
        %v423 = vmul.f32 %v407, %v390
        %v424 = vmul.f32 %v408, %v391
        %v425 = vmul.f32 %v409, %v392
        %v426 = vmul.f32 %v410, %v393
        %v427 = vadd.f32 %v411, %v419
        %v428 = vadd.f32 %v412, %v420
        %v429 = vadd.f32 %v413, %v421
        %v430 = vadd.f32 %v414, %v422
        %v431 = vadd.f32 %v415, %v423
        %v432 = vadd.f32 %v416, %v424
        %v433 = vadd.f32 %v417, %v425
        %v434 = vadd.f32 %v418, %v426
        %vm435 = vcmask 523264
        %436 = vst.msk [vmem:[%s247] sm:$0xff] %vm435, %v427
        %437 = vst.msk [vmem:[%s247 + $0x8] sm:$0xff] %vm435, %v428
        %438 = vst.msk [vmem:[%s247 + $0x10] sm:$0xff] %vm435, %v429
        %439 = vst.msk [vmem:[%s247 + $0x18] sm:$0xff] %vm435, %v430
        %440 = vst.msk [vmem:[%s247 + $0x20] sm:$0xff] %vm435, %v431
        %441 = vst.msk [vmem:[%s247 + $0x28] sm:$0xff] %vm435, %v432
        %442 = vst.msk [vmem:[%s247 + $0x30] sm:$0xff] %vm435, %v433
        %443 = vst.msk [vmem:[%s247 + $0x38] sm:$0xff] %vm435, %v434
        %v444 = vmul.f32 %v403, %v362
        %v445 = vmul.f32 %v404, %v363
        %v446 = vmul.f32 %v405, %v364
        %v447 = vmul.f32 %v406, %v365
        %v448 = vmul.f32 %v407, %v366
        %v449 = vmul.f32 %v408, %v367
        %v450 = vmul.f32 %v409, %v368
        %v451 = vmul.f32 %v410, %v369
        %v452 = vmul.f32 %v394, %v386
        %v453 = vmul.f32 %v395, %v387
        %v454 = vmul.f32 %v396, %v388
        %v455 = vmul.f32 %v397, %v389
        %v456 = vmul.f32 %v398, %v390
        %v457 = vmul.f32 %v399, %v391
        %v458 = vmul.f32 %v400, %v392
        %v459 = vmul.f32 %v401, %v393
        %v460 = vsub.f32 %v444, %v452
        %v461 = vsub.f32 %v445, %v453
        %v462 = vsub.f32 %v446, %v454
        %v463 = vsub.f32 %v447, %v455
        %v464 = vsub.f32 %v448, %v456
        %v465 = vsub.f32 %v449, %v457
        %v466 = vsub.f32 %v450, %v458
        %v467 = vsub.f32 %v451, %v459
        %s468 = scalar_lea.vmem %s247, 64 [#allocation5]
        %469 = vst.msk [vmem:[%s468] sm:$0xff] %vm435, %v460
        %470 = vst.msk [vmem:[%s468 + $0x8] sm:$0xff] %vm435, %v461
        %471 = vst.msk [vmem:[%s468 + $0x10] sm:$0xff] %vm435, %v462
        %472 = vst.msk [vmem:[%s468 + $0x18] sm:$0xff] %vm435, %v463
        %473 = vst.msk [vmem:[%s468 + $0x20] sm:$0xff] %vm435, %v464
        %474 = vst.msk [vmem:[%s468 + $0x28] sm:$0xff] %vm435, %v465
        %475 = vst.msk [vmem:[%s468 + $0x30] sm:$0xff] %vm435, %v466
        %476 = vst.msk [vmem:[%s468 + $0x38] sm:$0xff] %vm435, %v467
        %s477 = sand.u32 %s117, 1
        %s478 = scalar_lea.sflag [#allocation4], %s477
        %s479 = sand.u32 %s117, 1
        %s480 = smul.addr %s479, 128
        %s481 = scalar_lea.vmem [#allocation5], %s480
        // Predicated region
        $region37: #{tpu_custom_call.1} parent=31 // pred_check
          %p482 = pneg %p127
        $region38: #{tpu_custom_call.1} parent=31 // pred_check_branch
          %484 = sbr.rel (%p482) target = $region40
        $region39: #{tpu_custom_call.1} parent=31 // pred_region
          #allocation9 [shape = 'u32[6]{0}', space=smem, size = 0x18, scoped, tag = 'DMA stride descriptor']
          %s485 = smul.u32 8, %s25
          %s487 = ssub.s32 2048, 2048
          %488 = vsyncadd %s478, %s487
          %s489 = smul.addr %s24, 8
          %s490 = sadd.s32 %s485, %s489
          %s491 = smul.addr %s490, 128
          %s492 = scalar_lea.hbm %s3, %s491
          %s494 = sshll.u32 1, 14
          %s495 = sxor.u32 4294967295, %s494
          %s498 = sshll.u32 7, 18
          %s499 = sxor.u32 4294967295, %s498
          %s500 = sand.u32 0, %s499
          %s502 = sor.u32 %s500, 0
          %s504 = sshll.u32 3, 24
          %s505 = sxor.u32 4294967295, %s504
          %s506 = sand.u32 %s502, %s505
          %s508 = sor.u32 %s506, 0
          %s509 = sshll.u32 %s481, 4
          %s510 = int_to_ptr.vmem [resolvable:$true] %s509
          %516 = sst [smem:[#allocation9]] 1024
          %s517 = scalar_lea.smem [#allocation9], 1
          %518 = sst [smem:[%s517]] 2048
          %s519 = scalar_lea.smem [#allocation9], 2
          %520 = sst [smem:[%s519]] 8
          %s521 = scalar_lea.smem [#allocation9], 3
          %522 = sst [smem:[%s521]] 128
          %s523 = scalar_lea.smem [#allocation9], 4
          %524 = sst [smem:[%s523]] 128
          %s525 = scalar_lea.smem [#allocation9], 5
          %526 = sst [smem:[%s525]] 8
          %528 = dma.general %s510, 2048, %s492, %s478, [#allocation8], [#allocation9], %s508, 0
        $region40: #{tpu_custom_call.1} parent=31 // pred_fallthru
          _
      $region32: #{tpu_custom_call.1} parent=5 // pred_fallthru
        _
      %p529 = scmp.le.s32.totalorder 2, %s15
      // Predicated region
      $region41: #{tpu_custom_call.1} parent=5 // pred_check
        %p530 = pneg %p529
      $region42: #{tpu_custom_call.1} parent=5 // pred_check_branch
        %532 = sbr.rel (%p530) target = $region44
      $region43: #{tpu_custom_call.1} parent=5 // pred_region
        %s533 = ssub.s32 %s15, 2
        // Predicated region
        $region45: #{tpu_custom_call.1} parent=43 // pred_check
          %p534 = pneg %p133
        $region46: #{tpu_custom_call.1} parent=43 // pred_check_branch
          %536 = sbr.rel (%p534) target = $region48
        $region47: #{tpu_custom_call.1} parent=43 // pred_region
          %s537 = sand.u32 %s118, 1
          %s538 = scalar_lea.sflag [#allocation4], %s537
          %s539 = sand.u32 %s118, 1
          %s540 = smul.addr %s539, 128
          %s541 = scalar_lea.vmem [#allocation5], %s540
          %542 = dma.done %s538, 2048
        $region48: #{tpu_custom_call.1} parent=43 // pred_fallthru
          _
      $region44: #{tpu_custom_call.1} parent=5 // pred_fallthru
        _
    $region6: #{tpu_custom_call.1} parent=1 // loop_footer
      %s19 = sadd.s32 1, %s15
    $region7: #{tpu_custom_call.1} parent=1 // loop_footer_branch
      %14 = sbr.rel target = $region3
    $region8: #{tpu_custom_call.1} parent=1 // loop_exit
      _
    %543 = vsyncpa [#allocation3], 1
    %s544 = scalar_lea.sflag [#allocation3], 1
    %545 = vsyncpa %s544, 1
    %546 = vsyncpa [#allocation4], 1
    %s547 = scalar_lea.sflag [#allocation4], 1
    %548 = vsyncpa %s547, 1

</llo_original>
